<compile_context>
chip_gen: v5e
topology: v5e:2x2
jax: 0.10.0
libtpu: 0.0.40
codegen_flags: <defaults>
</compile_context>

<pallas_src>
import functools

import jax
import jax.numpy as jnp
from jax import lax
from jax.experimental import pallas as pl
from jax.experimental.pallas import tpu as pltpu


EXPANSION = 4
BN_EPS = 1e-5
LANE = 128


def _pad_to(n, m=LANE):
    return ((n + m - 1) // m) * m


# --------------------------------------------------------------------------------------
# Kernel 1: fused 1x1 conv (bf16 operands / f32 accum) + folded BN + optional ReLU
# --------------------------------------------------------------------------------------
def _pw_conv_bn_kernel(x_ref, w_ref, scale_ref, bias_ref, o_ref, *, relu):
    # x_ref: (TM, Cin) bf16, w_ref: (Cin, Cout) bf16, scale/bias: (1, Cout) f32
    y = jnp.dot(x_ref[...], w_ref[...], preferred_element_type=jnp.float32)
    y = y * scale_ref[...] + bias_ref[...]
    if relu:
        y = jnp.maximum(y, 0.0)
    o_ref[...] = y.astype(o_ref.dtype)


def pw_conv_bn(x2d, w, scale, bias, *, relu, out_dtype, tm=512):
    M, cin = x2d.shape
    cout = w.shape[1]
    tm = min(tm, M)
    grid_m = pl.cdiv(M, tm)
    kernel = functools.partial(_pw_conv_bn_kernel, relu=relu)
    return pl.pallas_call(
        kernel,
        out_shape=jax.ShapeDtypeStruct((M, cout), out_dtype),
        grid_spec=pltpu.PrefetchScalarGridSpec(
            num_scalar_prefetch=0,
            grid=(grid_m,),
            in_specs=[
                pl.BlockSpec((tm, cin), lambda i: (i, 0)),
                pl.BlockSpec((cin, cout), lambda i: (0, 0)),
                pl.BlockSpec((1, cout), lambda i: (0, 0)),
                pl.BlockSpec((1, cout), lambda i: (0, 0)),
            ],
            out_specs=pl.BlockSpec((tm, cout), lambda i: (i, 0)),
        ),
        compiler_params=pltpu.CompilerParams(dimension_semantics=("parallel",)),
    )(x2d, w, scale, bias)


# --------------------------------------------------------------------------------------
# Kernel 2: fused 3x3 conv via 9 per-tap matmuls accumulated in an f32 VMEM scratch,
#           + folded BN + ReLU.  Blocks nb batch images x tr output rows per grid step.
# --------------------------------------------------------------------------------------
def _conv3x3_bn_relu_kernel(xp_ref, w_ref, scale_ref, bias_ref, o_ref, acc_ref,
                            *, stride, nb, tr, wo, cin, cout):
    # xp_ref: (nb, Hp, Wp, Cin) bf16 padded images (resident per batch block)
    # w_ref:  (9*Cin, Cout) bf16 with (kh, kw, cin) row ordering
    # scale/bias: (1, Cout) f32;  o_ref: (nb, tr, wo, Cout) bf16
    # acc_ref: (nb*tr*wo, Cout) f32 VMEM accumulator
    r = pl.program_id(1)
    row0 = pl.multiple_of(r * (tr * stride), tr * stride)
    row_ext = (tr - 1) * stride + 3                              # static
    slab = xp_ref[:, pl.ds(row0, row_ext), :, :]                 # (nb, row_ext, Wp, Cin)

    for kh in range(3):
        rows = slab[:, kh:kh + (tr - 1) * stride + 1:stride]     # (nb, tr, Wp, Cin)
        for kw in range(3):
            tap = rows[:, :, kw:kw + (wo - 1) * stride + 1:stride, :]   # (nb, tr, wo, Cin)
            tap2d = tap.reshape(nb * tr * wo, cin)
            off = (kh * 3 + kw) * cin
            contrib = jnp.dot(tap2d, w_ref[off:off + cin, :],
                              preferred_element_type=jnp.float32)
            if kh == 0 and kw == 0:
                acc_ref[...] = contrib
            else:
                acc_ref[...] += contrib

    y = acc_ref[...] * scale_ref[...] + bias_ref[...]
    y = jnp.maximum(y, 0.0)
    o_ref[...] = y.reshape(nb, tr, wo, cout).astype(o_ref.dtype)


def _pick_tiles(b, ho, wo, target_rows=512):
    # largest divisor of ho whose matmul M-dim (tr*wo) stays <= target, then batch
    # additional images per step while nb*tr*wo stays <= target (no 1-row demotion).
    tr = 1
    for t in range(1, ho + 1):
        if ho % t == 0 and t * wo <= target_rows:
            tr = t
    nb = 1
    for n in range(1, b + 1):
        if b % n == 0 and n * tr * wo <= target_rows:
            nb = n
    return tr, nb


def conv3x3_bn_relu(x_nhwc, w2d, scale, bias, *, stride):
    b, h, w, cin = x_nhwc.shape
    cout = w2d.shape[1]
    assert w2d.shape[0] == 9 * cin
    ho = (h + 2 - 3) // stride + 1
    wo = (w + 2 - 3) // stride + 1
    xp = jnp.pad(x_nhwc, ((0, 0), (1, 1), (1, 1), (0, 0)))       # pad once (bf16 input)
    hp, wp = h + 2, w + 2
    tr, nb = _pick_tiles(b, ho, wo)
    kernel = functools.partial(_conv3x3_bn_relu_kernel, stride=stride,
                               nb=nb, tr=tr, wo=wo, cin=cin, cout=cout)
    return pl.pallas_call(
        kernel,
        out_shape=jax.ShapeDtypeStruct((b, ho, wo, cout), jnp.bfloat16),
        grid_spec=pltpu.PrefetchScalarGridSpec(
            num_scalar_prefetch=0,
            grid=(b // nb, ho // tr),
            in_specs=[
                pl.BlockSpec((nb, hp, wp, cin), lambda i, r: (i, 0, 0, 0)),
                pl.BlockSpec((9 * cin, cout), lambda i, r: (0, 0)),
                pl.BlockSpec((1, cout), lambda i, r: (0, 0)),
                pl.BlockSpec((1, cout), lambda i, r: (0, 0)),
            ],
            out_specs=pl.BlockSpec((nb, tr, wo, cout), lambda i, r: (i, r, 0, 0)),
            scratch_shapes=[pltpu.VMEM((nb * tr * wo, cout), jnp.float32)],
        ),
        compiler_params=pltpu.CompilerParams(
            dimension_semantics=("parallel", "parallel")),
    )(xp, w2d, scale, bias)


# --------------------------------------------------------------------------------------
# Kernel 3: fused 1x1 conv3 + BN3 + shortcut (projection conv+BN fused, or identity)
#           + residual add + ReLU.  Output emitted in bf16 (f32 math).
# --------------------------------------------------------------------------------------
def _pw_conv_bn_add_relu_kernel(h_ref, w_ref, s_ref, b_ref, sc_ref, o_ref):
    y = jnp.dot(h_ref[...], w_ref[...], preferred_element_type=jnp.float32)
    y = y * s_ref[...] + b_ref[...] + sc_ref[...].astype(jnp.float32)
    o_ref[...] = jnp.maximum(y, 0.0).astype(o_ref.dtype)


def _pw_conv_bn_proj_add_relu_kernel(h_ref, w_ref, s_ref, b_ref,
                                     xs_ref, wsc_ref, ssc_ref, bsc_ref, o_ref):
    y = jnp.dot(h_ref[...], w_ref[...], preferred_element_type=jnp.float32)
    y = y * s_ref[...] + b_ref[...]
    sc = jnp.dot(xs_ref[...], wsc_ref[...], preferred_element_type=jnp.float32)
    y = y + sc * ssc_ref[...] + bsc_ref[...]
    o_ref[...] = jnp.maximum(y, 0.0).astype(o_ref.dtype)


def pw_conv_bn_add_relu(h2d, w, scale, bias, sc2d, *, tm=512):
    M, cin = h2d.shape
    cout = w.shape[1]
    tm = min(tm, M)
    grid_m = pl.cdiv(M, tm)
    return pl.pallas_call(
        _pw_conv_bn_add_relu_kernel,
        out_shape=jax.ShapeDtypeStruct((M, cout), jnp.bfloat16),
        grid_spec=pltpu.PrefetchScalarGridSpec(
            num_scalar_prefetch=0,
            grid=(grid_m,),
            in_specs=[
                pl.BlockSpec((tm, cin), lambda i: (i, 0)),
                pl.BlockSpec((cin, cout), lambda i: (0, 0)),
                pl.BlockSpec((1, cout), lambda i: (0, 0)),
                pl.BlockSpec((1, cout), lambda i: (0, 0)),
                pl.BlockSpec((tm, cout), lambda i: (i, 0)),
            ],
            out_specs=pl.BlockSpec((tm, cout), lambda i: (i, 0)),
        ),
        compiler_params=pltpu.CompilerParams(dimension_semantics=("parallel",)),
    )(h2d, w, scale, bias, sc2d)


def pw_conv_bn_proj_add_relu(h2d, w, scale, bias, xs2d, wsc, ssc, bsc, *, tm=256):
    # tm=256 keeps stage-4 shapes under v5e's 16 MiB default scoped-VMEM limit.
    M, cin = h2d.shape
    cout = w.shape[1]
    cin_sc = xs2d.shape[1]
    tm = min(tm, M)
    grid_m = pl.cdiv(M, tm)
    return pl.pallas_call(
        _pw_conv_bn_proj_add_relu_kernel,
        out_shape=jax.ShapeDtypeStruct((M, cout), jnp.bfloat16),
        grid_spec=pltpu.PrefetchScalarGridSpec(
            num_scalar_prefetch=0,
            grid=(grid_m,),
            in_specs=[
                pl.BlockSpec((tm, cin), lambda i: (i, 0)),
                pl.BlockSpec((cin, cout), lambda i: (0, 0)),
                pl.BlockSpec((1, cout), lambda i: (0, 0)),
                pl.BlockSpec((1, cout), lambda i: (0, 0)),
                pl.BlockSpec((tm, cin_sc), lambda i: (i, 0)),
                pl.BlockSpec((cin_sc, cout), lambda i: (0, 0)),
                pl.BlockSpec((1, cout), lambda i: (0, 0)),
                pl.BlockSpec((1, cout), lambda i: (0, 0)),
            ],
            out_specs=pl.BlockSpec((tm, cout), lambda i: (i, 0)),
        ),
        compiler_params=pltpu.CompilerParams(dimension_semantics=("parallel",)),
    )(h2d, w, scale, bias, xs2d, wsc, ssc, bsc)


# --------------------------------------------------------------------------------------
# Parameter setup (deterministic, eval-mode BN folded into scale/bias), unpadded f32
# --------------------------------------------------------------------------------------
def init_params(key, in_planes, planes, stride):
    ks = jax.random.split(key, 8)

    def conv_w(k, shape):
        return 0.1 * jax.random.normal(k, shape, jnp.float32)

    def bn_fold(k, c):
        k1, k2, k3, k4 = jax.random.split(k, 4)
        gamma = 1.0 + 0.1 * jax.random.normal(k1, (c,), jnp.float32)
        beta = 0.1 * jax.random.normal(k2, (c,), jnp.float32)
        mean = 0.1 * jax.random.normal(k3, (c,), jnp.float32)
        var = 1.0 + 0.1 * jnp.abs(jax.random.normal(k4, (c,), jnp.float32))
        scale = gamma / jnp.sqrt(var + BN_EPS)
        bias = beta - mean * scale
        return scale.reshape(1, c), bias.reshape(1, c)

    c3 = EXPANSION * planes
    p = {}
    p["w1"] = conv_w(ks[0], (in_planes, planes))          # 1x1 conv as (Cin, Cout)
    p["s1"], p["b1"] = bn_fold(ks[1], planes)
    p["w2"] = conv_w(ks[2], (3, 3, planes, planes))       # HWIO
    p["s2"], p["b2"] = bn_fold(ks[3], planes)
    p["w3"] = conv_w(ks[4], (planes, c3))
    p["s3"], p["b3"] = bn_fold(ks[5], c3)
    if stride != 1 or in_planes != c3:
        p["wsc"] = conv_w(ks[6], (in_planes, c3))
        p["ssc"], p["bsc"] = bn_fold(ks[7], c3)
    else:
        p["wsc"] = None
    return p


# --------------------------------------------------------------------------------------
# One-time kernel-param prep: pad channels to lane multiples (128), cast weights to bf16.
# Zero-padded scale/bias guarantee padded output channels stay exactly 0 end-to-end.
# --------------------------------------------------------------------------------------
def prepare_kernel_params(p, in_planes, planes):
    bf = jnp.bfloat16
    c3 = EXPANSION * planes
    cin_p, planes_p, c3_p = _pad_to(in_planes), _pad_to(planes), _pad_to(c3)

    def pad_w(w, r, c):
        return jnp.pad(w, ((0, r - w.shape[0]), (0, c - w.shape[1]))).astype(bf)

    def pad_sb(s, b, c):
        return (jnp.pad(s, ((0, 0), (0, c - s.shape[1]))),
                jnp.pad(b, ((0, 0), (0, c - b.shape[1]))))

    kp = {"in_planes": in_planes, "planes": planes, "c3": c3,
          "cin_p": cin_p, "planes_p": planes_p, "c3_p": c3_p}
    kp["w1"] = pad_w(p["w1"], cin_p, planes_p)
    kp["s1"], kp["b1"] = pad_sb(p["s1"], p["b1"], planes_p)
    w2 = jnp.pad(p["w2"], ((0, 0), (0, 0),
                           (0, planes_p - planes), (0, planes_p - planes)))
    kp["w2"] = w2.reshape(9 * planes_p, planes_p).astype(bf)   # (kh, kw, cin) row order
    kp["s2"], kp["b2"] = pad_sb(p["s2"], p["b2"], planes_p)
    kp["w3"] = pad_w(p["w3"], planes_p, c3_p)
    kp["s3"], kp["b3"] = pad_sb(p["s3"], p["b3"], c3_p)
    if p["wsc"] is not None:
        kp["wsc"] = pad_w(p["wsc"], cin_p, c3_p)
        kp["ssc"], kp["bsc"] = pad_sb(p["ssc"], p["bsc"], c3_p)
    else:
        kp["wsc"] = None
    return kp


# --------------------------------------------------------------------------------------
# Full Bottleneck forward (NCHW in / NCHW out, kernels run in lane-padded NHWC)
# --------------------------------------------------------------------------------------
def bottleneck_forward(x_nchw, kp, stride):
    bf = jnp.bfloat16
    x = jnp.transpose(x_nchw, (0, 2, 3, 1))                # NCHW -> NHWC
    b, h, w, cin = x.shape
    cin_p, planes_p, c3_p, c3 = kp["cin_p"], kp["planes_p"], kp["c3_p"], kp["c3"]
    x_bf = jnp.pad(x.astype(bf), ((0, 0), (0, 0), (0, 0), (0, cin_p - cin)))

    # conv1 (1x1) + bn1 + relu  (bf16 out, lane-padded channels)
    h1 = pw_conv_bn(x_bf.reshape(b * h * w, cin_p), kp["w1"], kp["s1"], kp["b1"],
                    relu=True, out_dtype=bf)
    h1 = h1.reshape(b, h, w, planes_p)

    # conv2 (3x3, stride, pad=1) + bn2 + relu  (bf16 out)
    h2 = conv3x3_bn_relu(h1, kp["w2"], kp["s2"], kp["b2"], stride=stride)
    _, ho, wo, _ = h2.shape
    mo = b * ho * wo

    # conv3 (1x1) + bn3 + shortcut + residual add + relu (shortcut fused in-kernel)
    if kp["wsc"] is not None:
        if stride == 1:
            xs = x_bf.reshape(mo, cin_p)
        else:
            xs = x_bf[:, ::stride, ::stride, :].reshape(mo, cin_p)
        out = pw_conv_bn_proj_add_relu(h2.reshape(mo, planes_p), kp["w3"],
                                       kp["s3"], kp["b3"],
                                       xs, kp["wsc"], kp["ssc"], kp["bsc"])
    else:
        sc = x_bf.reshape(mo, c3_p)                        # identity (cin == c3, stride == 1)
        out = pw_conv_bn_add_relu(h2.reshape(mo, planes_p), kp["w3"],
                                  kp["s3"], kp["b3"], sc)
    out = out.reshape(b, ho, wo, c3_p)[..., :c3]           # drop lane padding
    return jnp.transpose(out, (0, 3, 1, 2))                # NHWC -> NCHW (bf16)


# --------------------------------------------------------------------------------------
# Pure-JAX reference (mirrors the kernel's bf16 operand / f32 accumulation scheme)
# --------------------------------------------------------------------------------------
def bottleneck_ref(x_nchw, p, stride):
    dn = ("NHWC", "HWIO", "NHWC")
    bf = jnp.bfloat16
    x = jnp.transpose(x_nchw, (0, 2, 3, 1))
    xb = x.astype(bf)

    def conv(v, w_hwio, s, pad):
        return lax.conv_general_dilated(v.astype(bf), w_hwio.astype(bf), (s, s), pad,
                                        dimension_numbers=dn,
                                        preferred_element_type=jnp.float32)

    def as1x1(w):
        return w.reshape(1, 1, *w.shape)

    h = conv(xb, as1x1(p["w1"]), 1, "VALID")
    h = jnp.maximum(h * p["s1"] + p["b1"], 0.0).astype(bf)
    h = conv(h, p["w2"], stride, ((1, 1), (1, 1)))
    h = jnp.maximum(h * p["s2"] + p["b2"], 0.0).astype(bf)
    h = conv(h, as1x1(p["w3"]), 1, "VALID")
    h = h * p["s3"] + p["b3"]
    if p["wsc"] is not None:
        sc = conv(xb, as1x1(p["wsc"]), stride, "VALID") * p["ssc"] + p["bsc"]
    else:
        sc = x
    out = jnp.maximum(h + sc, 0.0)
    return jnp.transpose(out, (0, 3, 1, 2))


# --------------------------------------------------------------------------------------
if __name__ == "__main__":
    key = jax.random.PRNGKey(0)
    k_x, k_p = jax.random.split(key)

    batch, in_planes, planes, hw, stride = 2, 16, 8, 8, 1   # projection-shortcut path active
    x = jax.random.normal(k_x, (batch, in_planes, hw, hw), jnp.float32)  # NCHW, like PyTorch
    params = init_params(k_p, in_planes, planes, stride)
    kparams = prepare_kernel_params(params, in_planes, planes)

    out = bottleneck_forward(x, kparams, stride)
    out = jax.block_until_ready(out)

    ref = jax.block_until_ready(bottleneck_ref(x, params, stride))
    assert out.shape == (batch, EXPANSION * planes, hw, hw), out.shape
    diff = jnp.max(jnp.abs(out.astype(jnp.float32) - ref))
    assert jnp.allclose(out.astype(jnp.float32), ref, atol=2e-2, rtol=2e-2), float(diff)

    print("KERNEL_OK")
</pallas_src>

<mosaic_0001>
module attributes {stable_mosaic.version = 11 : i64} {
  func.func @_pw_conv_bn_kernel(%arg0: i32, %arg1: memref<128x128xbf16, #tpu.memory_space<vmem>>, %arg2: memref<128x128xbf16, #tpu.memory_space<vmem>>, %arg3: memref<1x128xf32, #tpu.memory_space<vmem>>, %arg4: memref<1x128xf32, #tpu.memory_space<vmem>>, %arg5: memref<128x128xbf16, #tpu.memory_space<vmem>>) attributes {dimension_semantics = [#tpu.dimension_semantics<parallel>], iteration_bounds = array<i64: 1>, scalar_prefetch = 0 : i64, scratch_operands = 0 : i64, tpu.core_type = #tpu.core_type<tc>, window_params = [{transform_indices = @transform_0, window_bounds = array<i64: 128, 128>}, {pipeline_mode = #tpu.pipeline_mode<synchronous>, transform_indices = @transform_1, window_bounds = array<i64: 128, 128>}, {pipeline_mode = #tpu.pipeline_mode<synchronous>, transform_indices = @transform_2, window_bounds = array<i64: 1, 128>}, {pipeline_mode = #tpu.pipeline_mode<synchronous>, transform_indices = @transform_3, window_bounds = array<i64: 1, 128>}, {transform_indices = @transform_4, window_bounds = array<i64: 128, 128>}]} {
    %c0 = arith.constant 0 : index
    %c0_0 = arith.constant 0 : index
    %0 = vector.load %arg1[%c0, %c0_0] : memref<128x128xbf16, #tpu.memory_space<vmem>>, vector<128x128xbf16>
    %c0_1 = arith.constant 0 : index
    %c0_2 = arith.constant 0 : index
    %1 = vector.load %arg2[%c0_1, %c0_2] : memref<128x128xbf16, #tpu.memory_space<vmem>>, vector<128x128xbf16>
    %cst = arith.constant dense<0.000000e+00> : vector<128x128xf32>
    %2 = tpu.matmul %0, %1, %cst {dimension_numbers = #tpu.dot_dimension_numbers<[1], [0], [0], [1], [0, 0, 1, 1], [], []>} : vector<128x128xbf16>, vector<128x128xbf16>, vector<128x128xf32> -> vector<128x128xf32>
    %c0_3 = arith.constant 0 : index
    %c0_4 = arith.constant 0 : index
    %3 = vector.load %arg3[%c0_3, %c0_4] : memref<1x128xf32, #tpu.memory_space<vmem>>, vector<1x128xf32>
    %4 = vector.broadcast %3 : vector<1x128xf32> to vector<128x128xf32>
    %5 = arith.mulf %2, %4 : vector<128x128xf32>
    %c0_5 = arith.constant 0 : index
    %c0_6 = arith.constant 0 : index
    %6 = vector.load %arg4[%c0_5, %c0_6] : memref<1x128xf32, #tpu.memory_space<vmem>>, vector<1x128xf32>
    %7 = vector.broadcast %6 : vector<1x128xf32> to vector<128x128xf32>
    %8 = arith.addf %5, %7 : vector<128x128xf32>
    %cst_7 = arith.constant 0.000000e+00 : f32
    %9 = vector.broadcast %cst_7 : f32 to vector<128x128xf32>
    %10 = arith.maximumf %8, %9 : vector<128x128xf32>
    %11 = arith.truncf %10 : vector<128x128xf32> to vector<128x128xbf16>
    %c0_8 = arith.constant 0 : index
    %c0_9 = arith.constant 0 : index
    %12 = vector.load %arg5[%c0_8, %c0_9] : memref<128x128xbf16, #tpu.memory_space<vmem>>, vector<128x128xbf16>
    tpu.vector_store %arg5[%c0_8, %c0_9], %11 {strides = array<i32>} : memref<128x128xbf16, #tpu.memory_space<vmem>>, vector<128x128xbf16>,
    return
  }
  func.func @transform_0(%arg0: i32) -> (i32, i32) {
    %c0_i32 = arith.constant 0 : i32
    %c0_i32_0 = arith.constant 0 : i32
    return %arg0, %c0_i32 : i32, i32
  }
  func.func @transform_1(%arg0: i32) -> (i32, i32) {
    %c0_i32 = arith.constant 0 : i32
    %c0_i32_0 = arith.constant 0 : i32
    %c0_i32_1 = arith.constant 0 : i32
    return %c0_i32, %c0_i32_0 : i32, i32
  }
  func.func @transform_2(%arg0: i32) -> (i32, i32) {
    %c0_i32 = arith.constant 0 : i32
    %c0_i32_0 = arith.constant 0 : i32
    %c0_i32_1 = arith.constant 0 : i32
    return %c0_i32, %c0_i32_0 : i32, i32
  }
  func.func @transform_3(%arg0: i32) -> (i32, i32) {
    %c0_i32 = arith.constant 0 : i32
    %c0_i32_0 = arith.constant 0 : i32
    %c0_i32_1 = arith.constant 0 : i32
    return %c0_i32, %c0_i32_0 : i32, i32
  }
  func.func @transform_4(%arg0: i32) -> (i32, i32) {
    %c0_i32 = arith.constant 0 : i32
    %c0_i32_0 = arith.constant 0 : i32
    return %arg0, %c0_i32 : i32, i32
  }
}

</mosaic_0001>

<llo_original>
// kernel: tpu_custom_call.1
$region0: #{tpu_custom_call.1}
  #allocation0 [shape = 'u32[]', space=smem, size = 0x4, offset = 0x4, fixed_abs, tag = 'smem constant byte address 0x4 - core index']
  #allocation1 [shape = 'u32[72,128]{1,0:T(1,128)}', space=vmem, size = 0x9000, scoped, tag = 'internal scratch']
  %s0 = inlined_call_operand.hbm [shape: bf16[128,128], index: 0, kind: input, shape index: {}]
  %s1 = inlined_call_operand.hbm [shape: bf16[128,128], index: 1, kind: input, shape index: {}]
  %s2 = inlined_call_operand.vmem [shape: f32[1,128], index: 2, kind: input, shape index: {}]
  %s3 = inlined_call_operand.vmem [shape: f32[1,128], index: 3, kind: input, shape index: {}]
  %s4 = inlined_call_operand.hbm [shape: bf16[128,128], index: 4, kind: output, shape index: {}]
  %s5 = sld [smem:[#allocation0]]
  $region34: #{tpu_custom_call.1} parent=0
    _
  %s7 = ssub.s32 1, %s5
  %s8 = scalar_select 0, %s7, %s5
  $region1: #{tpu_custom_call.1} parent=0
    #allocation2 [shape = 'u8[32768]{0}', space=vmem, size = 0x8000, scoped, tag = 'input window, operand 0, single buffered']
    #allocation3 [shape = 's32[1]{0}', space=sflag, size = 0x4, scoped, tag = 'scoped memory for tpu_custom_call.1']
    #allocation4 [shape = 's32[1]{0}', space=sflag, size = 0x4, scoped, tag = 'scoped memory for tpu_custom_call.1']
    #allocation5 [shape = 'u8[32768]{0}', space=vmem, size = 0x8000, scoped, tag = 'input window, operand 1, single buffered']
    #allocation6 [shape = 's32[1]{0}', space=sflag, size = 0x4, scoped, tag = 'scoped memory for tpu_custom_call.1']
    #allocation7 [shape = 'u8[32768]{0}', space=vmem, size = 0x8000, scoped, tag = 'output window, operand 0, single buffered']
    %9 = vsyncpa [#allocation3], 0
    %10 = vsyncpa [#allocation6], 0
    %11 = vsyncpa [#allocation4], 0
    // Predicated region
    $region2: #{tpu_custom_call.1} parent=1 // pred_check
      _
    $region3: #{tpu_custom_call.1} parent=1 // pred_check_branch
      %13 = sbr.rel (0) target = $region5
    $region4: #{tpu_custom_call.1} parent=1 // pred_region
      %15 = vsyncadd [#allocation3], 0
      %s16 = sshll.u32 %s0, 4
      %s17 = int_to_ptr.hbm [resolvable:$true] %s16
      %s18 = sshll.u32 [#allocation2], 4
      %s19 = int_to_ptr.vmem [resolvable:$true] %s18
      %24 = dma.hbm_to_vmem [thread:$0]  %s17, 1024, %s19, [#allocation3], 64, 64, 4
    $region5: #{tpu_custom_call.1} parent=1 // pred_fallthru
      _
    // Predicated region
    $region6: #{tpu_custom_call.1} parent=1 // pred_check
      _
    $region7: #{tpu_custom_call.1} parent=1 // pred_check_branch
      %26 = sbr.rel (0) target = $region9
    $region8: #{tpu_custom_call.1} parent=1 // pred_region
      %28 = vsyncadd [#allocation6], 0
      %s29 = sshll.u32 %s1, 4
      %s30 = int_to_ptr.hbm [resolvable:$true] %s29
      %s31 = sshll.u32 [#allocation5], 4
      %s32 = int_to_ptr.vmem [resolvable:$true] %s31
      %37 = dma.hbm_to_vmem [thread:$0]  %s30, 1024, %s32, [#allocation6], 64, 64, 4
    $region9: #{tpu_custom_call.1} parent=1 // pred_fallthru
      _
    // Predicated region
    $region10: #{tpu_custom_call.1} parent=1 // pred_check
      _
    $region11: #{tpu_custom_call.1} parent=1 // pred_check_branch
      %39 = sbr.rel (0) target = $region13
    $region12: #{tpu_custom_call.1} parent=1 // pred_region
      _
    $region13: #{tpu_custom_call.1} parent=1 // pred_fallthru
      _
    // Predicated region
    $region14: #{tpu_custom_call.1} parent=1 // pred_check
      _
    $region15: #{tpu_custom_call.1} parent=1 // pred_check_branch
      %41 = sbr.rel (0) target = $region17
    $region16: #{tpu_custom_call.1} parent=1 // pred_region
      _
    $region17: #{tpu_custom_call.1} parent=1 // pred_fallthru
      _
    // Predicated region
    $region18: #{tpu_custom_call.1} parent=1 // pred_check
      _
    $region19: #{tpu_custom_call.1} parent=1 // pred_check_branch
      %43 = sbr.rel (0) target = $region21
    $region20: #{tpu_custom_call.1} parent=1 // pred_region
      %45 = dma.done [#allocation3], 1024
    $region21: #{tpu_custom_call.1} parent=1 // pred_fallthru
      _
    // Predicated region
    $region22: #{tpu_custom_call.1} parent=1 // pred_check
      _
    $region23: #{tpu_custom_call.1} parent=1 // pred_check_branch
      %47 = sbr.rel (0) target = $region25
    $region24: #{tpu_custom_call.1} parent=1 // pred_region
      %49 = dma.done [#allocation6], 1024
    $region25: #{tpu_custom_call.1} parent=1 // pred_fallthru
      _
    %v50 = vld [vmem:[#allocation2] sm:$0xf]
    %v51 = vld [vmem:[#allocation2 + $0x4] sm:$0xf]
    %v52 = vld [vmem:[#allocation2 + $0x8] sm:$0xf]
    %v53 = vld [vmem:[#allocation2 + $0xc] sm:$0xf]
    %v54 = vld [vmem:[#allocation2 + $0x10] sm:$0xf]
    %v55 = vld [vmem:[#allocation2 + $0x14] sm:$0xf]
    %v56 = vld [vmem:[#allocation2 + $0x18] sm:$0xf]
    %v57 = vld [vmem:[#allocation2 + $0x1c] sm:$0xf]
    %v58 = vld [vmem:[#allocation2 + $0x20] sm:$0xf]
    %v59 = vld [vmem:[#allocation2 + $0x24] sm:$0xf]
    %v60 = vld [vmem:[#allocation2 + $0x28] sm:$0xf]
    %v61 = vld [vmem:[#allocation2 + $0x2c] sm:$0xf]
    %v62 = vld [vmem:[#allocation2 + $0x30] sm:$0xf]
    %v63 = vld [vmem:[#allocation2 + $0x34] sm:$0xf]
    %v64 = vld [vmem:[#allocation2 + $0x38] sm:$0xf]
    %v65 = vld [vmem:[#allocation2 + $0x3c] sm:$0xf]
    %v66 = vld [vmem:[#allocation5] sm:$0xf]
    %v67 = vld [vmem:[#allocation5 + $0x4] sm:$0xf]
    %v68 = vld [vmem:[#allocation5 + $0x8] sm:$0xf]
    %v69 = vld [vmem:[#allocation5 + $0xc] sm:$0xf]
    %v70 = vld [vmem:[#allocation5 + $0x10] sm:$0xf]
    %v71 = vld [vmem:[#allocation5 + $0x14] sm:$0xf]
    %v72 = vld [vmem:[#allocation5 + $0x18] sm:$0xf]
    %v73 = vld [vmem:[#allocation5 + $0x1c] sm:$0xf]
    %v74 = vld [vmem:[#allocation5 + $0x20] sm:$0xf]
    %v75 = vld [vmem:[#allocation5 + $0x24] sm:$0xf]
    %v76 = vld [vmem:[#allocation5 + $0x28] sm:$0xf]
    %v77 = vld [vmem:[#allocation5 + $0x2c] sm:$0xf]
    %v78 = vld [vmem:[#allocation5 + $0x30] sm:$0xf]
    %v79 = vld [vmem:[#allocation5 + $0x34] sm:$0xf]
    %v80 = vld [vmem:[#allocation5 + $0x38] sm:$0xf]
    %v81 = vld [vmem:[#allocation5 + $0x3c] sm:$0xf]
    %v98 = vunpack.c.l.b16 %v50
    %v99 = vunpack.c.l.b16 %v51
    %v100 = vunpack.c.l.b16 %v52
    %v101 = vunpack.c.l.b16 %v53
    %v102 = vunpack.c.l.b16 %v54
    %v103 = vunpack.c.l.b16 %v55
    %v104 = vunpack.c.l.b16 %v56
    %v105 = vunpack.c.l.b16 %v57
    %v106 = vunpack.c.l.b16 %v58
    %v107 = vunpack.c.l.b16 %v59
    %v108 = vunpack.c.l.b16 %v60
    %v109 = vunpack.c.l.b16 %v61
    %v110 = vunpack.c.l.b16 %v62
    %v111 = vunpack.c.l.b16 %v63
    %v112 = vunpack.c.l.b16 %v64
    %v113 = vunpack.c.l.b16 %v65
    %v114 = vpack.c.b16 %v99, %v98
    %v115 = vpack.c.b16 %v101, %v100
    %v116 = vpack.c.b16 %v103, %v102
    %v117 = vpack.c.b16 %v105, %v104
    %v118 = vpack.c.b16 %v107, %v106
    %v119 = vpack.c.b16 %v109, %v108
    %v120 = vpack.c.b16 %v111, %v110
    %v121 = vpack.c.b16 %v113, %v112
    %v146 = vunpack.c.l.b16 %v66
    %v147 = vunpack.c.l.b16 %v67
    %v148 = vunpack.c.l.b16 %v68
    %v149 = vunpack.c.l.b16 %v69
    %v150 = vunpack.c.l.b16 %v70
    %v151 = vunpack.c.l.b16 %v71
    %v152 = vunpack.c.l.b16 %v72
    %v153 = vunpack.c.l.b16 %v73
    %v154 = vunpack.c.l.b16 %v74
    %v155 = vunpack.c.l.b16 %v75
    %v156 = vunpack.c.l.b16 %v76
    %v157 = vunpack.c.l.b16 %v77
    %v158 = vunpack.c.l.b16 %v78
    %v159 = vunpack.c.l.b16 %v79
    %v160 = vunpack.c.l.b16 %v80
    %v161 = vunpack.c.l.b16 %v81
    %v162 = vpack.c.b16 %v147, %v146
    %v163 = vpack.c.b16 %v149, %v148
    %v164 = vpack.c.b16 %v151, %v150
    %v165 = vpack.c.b16 %v153, %v152
    %v166 = vpack.c.b16 %v155, %v154
    %v167 = vpack.c.b16 %v157, %v156
    %v168 = vpack.c.b16 %v159, %v158
    %v169 = vpack.c.b16 %v161, %v160
    %178 = vmatpush.bf16.msra.mxu0 %v169
    %179 = vmatpush.bf16.msra.mxu0 %v168
    %180 = vmatpush.bf16.msra.mxu0 %v167
    %181 = vmatpush.bf16.msra.mxu0 %v166
    %182 = vmatpush.bf16.msra.mxu0 %v165
    %183 = vmatpush.bf16.msra.mxu0 %v164
    %184 = vmatpush.bf16.msra.mxu0 %v163
    %185 = vmatpush.bf16.msra.mxu0 %v162
    %186 = vmatmul.bf16.gmra.mxu0 %v114
    %v187 = vpop.f32.mrf.mxu0
    %v188 = vadd.f32 0.0, %v187
    %v189 = vpop.f32.mrf.mxu0
    %v190 = vadd.f32 0.0, %v189
    %191 = vmatmul.bf16.gmra.mxu0 %v115
    %v192 = vpop.f32.mrf.mxu0
    %v193 = vadd.f32 0.0, %v192
    %v194 = vpop.f32.mrf.mxu0
    %v195 = vadd.f32 0.0, %v194
    %196 = vmatmul.bf16.gmra.mxu0 %v116
    %v197 = vpop.f32.mrf.mxu0
    %v198 = vadd.f32 0.0, %v197
    %v199 = vpop.f32.mrf.mxu0
    %v200 = vadd.f32 0.0, %v199
    %201 = vmatmul.bf16.gmra.mxu0 %v117
    %v202 = vpop.f32.mrf.mxu0
    %v203 = vadd.f32 0.0, %v202
    %v204 = vpop.f32.mrf.mxu0
    %v205 = vadd.f32 0.0, %v204
    %206 = vmatmul.bf16.gmra.mxu0 %v118
    %v207 = vpop.f32.mrf.mxu0
    %v208 = vadd.f32 0.0, %v207
    %v209 = vpop.f32.mrf.mxu0
    %v210 = vadd.f32 0.0, %v209
    %211 = vmatmul.bf16.gmra.mxu0 %v119
    %v212 = vpop.f32.mrf.mxu0
    %v213 = vadd.f32 0.0, %v212
    %v214 = vpop.f32.mrf.mxu0
    %v215 = vadd.f32 0.0, %v214
    %216 = vmatmul.bf16.gmra.mxu0 %v120
    %v217 = vpop.f32.mrf.mxu0
    %v218 = vadd.f32 0.0, %v217
    %v219 = vpop.f32.mrf.mxu0
    %v220 = vadd.f32 0.0, %v219
    %221 = vmatmul.bf16.gmra.mxu0 %v121
    %v222 = vpop.f32.mrf.mxu0
    %v223 = vadd.f32 0.0, %v222
    %v224 = vpop.f32.mrf.mxu0
    %v225 = vadd.f32 0.0, %v224
    %226 = vdwg.mxu0
    %v227 = vld [vmem:[%s2] sm:$0x1]
    %v229 = vperm.slane %v227, 0
    %v231 = vmul.f32 %v188, %v229
    %v232 = vmul.f32 %v190, %v229
    %v233 = vmul.f32 %v193, %v229
    %v234 = vmul.f32 %v195, %v229
    %v235 = vmul.f32 %v198, %v229
    %v236 = vmul.f32 %v200, %v229
    %v237 = vmul.f32 %v203, %v229
    %v238 = vmul.f32 %v205, %v229
    %v239 = vmul.f32 %v208, %v229
    %v240 = vmul.f32 %v210, %v229
    %v241 = vmul.f32 %v213, %v229
    %v242 = vmul.f32 %v215, %v229
    %v243 = vmul.f32 %v218, %v229
    %v244 = vmul.f32 %v220, %v229
    %v245 = vmul.f32 %v223, %v229
    %v246 = vmul.f32 %v225, %v229
    %v247 = vld [vmem:[%s3] sm:$0x1]
    %v249 = vperm.slane %v247, 0
    %v251 = vadd.f32 %v231, %v249
    %v252 = vadd.f32 %v232, %v249
    %v253 = vadd.f32 %v233, %v249
    %v254 = vadd.f32 %v234, %v249
    %v255 = vadd.f32 %v235, %v249
    %v256 = vadd.f32 %v236, %v249
    %v257 = vadd.f32 %v237, %v249
    %v258 = vadd.f32 %v238, %v249
    %v259 = vadd.f32 %v239, %v249
    %v260 = vadd.f32 %v240, %v249
    %v261 = vadd.f32 %v241, %v249
    %v262 = vadd.f32 %v242, %v249
    %v263 = vadd.f32 %v243, %v249
    %v264 = vadd.f32 %v244, %v249
    %v265 = vadd.f32 %v245, %v249
    %v266 = vadd.f32 %v246, %v249
    %v267 = vmax.f32 %v251, 0.0
    %v268 = vmax.f32 %v252, 0.0
    %v269 = vmax.f32 %v253, 0.0
    %v270 = vmax.f32 %v254, 0.0
    %v271 = vmax.f32 %v255, 0.0
    %v272 = vmax.f32 %v256, 0.0
    %v273 = vmax.f32 %v257, 0.0
    %v274 = vmax.f32 %v258, 0.0
    %v275 = vmax.f32 %v259, 0.0
    %v276 = vmax.f32 %v260, 0.0
    %v277 = vmax.f32 %v261, 0.0
    %v278 = vmax.f32 %v262, 0.0
    %v279 = vmax.f32 %v263, 0.0
    %v280 = vmax.f32 %v264, 0.0
    %v281 = vmax.f32 %v265, 0.0
    %v282 = vmax.f32 %v266, 0.0
    %v283 = vpack.c.bf16 %v267, %v267
    %v284 = vpack.c.bf16 %v268, %v268
    %v285 = vpack.c.bf16 %v269, %v269
    %v286 = vpack.c.bf16 %v270, %v270
    %v287 = vpack.c.bf16 %v271, %v271
    %v288 = vpack.c.bf16 %v272, %v272
    %v289 = vpack.c.bf16 %v273, %v273
    %v290 = vpack.c.bf16 %v274, %v274
    %v291 = vpack.c.bf16 %v275, %v275
    %v292 = vpack.c.bf16 %v276, %v276
    %v293 = vpack.c.bf16 %v277, %v277
    %v294 = vpack.c.bf16 %v278, %v278
    %v295 = vpack.c.bf16 %v279, %v279
    %v296 = vpack.c.bf16 %v280, %v280
    %v297 = vpack.c.bf16 %v281, %v281
    %v298 = vpack.c.bf16 %v282, %v282
    %299 = vst [vmem:[#allocation7] sm:$0xf] %v283
    %300 = vst [vmem:[#allocation7 + $0x4] sm:$0xf] %v284
    %301 = vst [vmem:[#allocation7 + $0x8] sm:$0xf] %v285
    %302 = vst [vmem:[#allocation7 + $0xc] sm:$0xf] %v286
    %303 = vst [vmem:[#allocation7 + $0x10] sm:$0xf] %v287
    %304 = vst [vmem:[#allocation7 + $0x14] sm:$0xf] %v288
    %305 = vst [vmem:[#allocation7 + $0x18] sm:$0xf] %v289
    %306 = vst [vmem:[#allocation7 + $0x1c] sm:$0xf] %v290
    %307 = vst [vmem:[#allocation7 + $0x20] sm:$0xf] %v291
    %308 = vst [vmem:[#allocation7 + $0x24] sm:$0xf] %v292
    %309 = vst [vmem:[#allocation7 + $0x28] sm:$0xf] %v293
    %310 = vst [vmem:[#allocation7 + $0x2c] sm:$0xf] %v294
    %311 = vst [vmem:[#allocation7 + $0x30] sm:$0xf] %v295
    %312 = vst [vmem:[#allocation7 + $0x34] sm:$0xf] %v296
    %313 = vst [vmem:[#allocation7 + $0x38] sm:$0xf] %v297
    %314 = vst [vmem:[#allocation7 + $0x3c] sm:$0xf] %v298
    // Predicated region
    $region26: #{tpu_custom_call.1} parent=1 // pred_check
      _
    $region27: #{tpu_custom_call.1} parent=1 // pred_check_branch
      %316 = sbr.rel (0) target = $region29
    $region28: #{tpu_custom_call.1} parent=1 // pred_region
      %318 = vsyncadd [#allocation4], 0
      %s319 = sshll.u32 [#allocation7], 4
      %s320 = int_to_ptr.vmem [resolvable:$true] %s319
      %s321 = sshll.u32 %s4, 4
      %s322 = int_to_ptr.hbm [resolvable:$true] %s321
      %327 = dma.vmem_to_hbm [thread:$0]  %s320, 1024, %s322, [#allocation4], 64, 64, 4
    $region29: #{tpu_custom_call.1} parent=1 // pred_fallthru
      _
    // Predicated region
    $region30: #{tpu_custom_call.1} parent=1 // pred_check
      _
    $region31: #{tpu_custom_call.1} parent=1 // pred_check_branch
      %329 = sbr.rel (0) target = $region33
    $region32: #{tpu_custom_call.1} parent=1 // pred_region
      %331 = dma.done [#allocation4], 1024
    $region33: #{tpu_custom_call.1} parent=1 // pred_fallthru
      _
    %332 = vsyncpa [#allocation3], 1
    %333 = vsyncpa [#allocation6], 1
    %334 = vsyncpa [#allocation4], 1

</llo_original>
